<compile_context>
chip_gen: v5e
topology: v5e:2x2
jax: 0.10.0
libtpu: 0.0.40
codegen_flags: <defaults>
</compile_context>

<pallas_src>
import math

import jax
import jax.numpy as jnp
from jax.experimental import pallas as pl

# ----------------------- synthetic promonet configuration (small) -----------------------
PPG_CHANNELS = 16            # promonet.PPG_CHANNELS
PITCH_BINS = 64              # promonet.PITCH_BINS
PITCH_EMBEDDING_SIZE = 8     # promonet.PITCH_EMBEDDING_SIZE
LOUDNESS_BANDS = 4           # promonet.LOUDNESS_BANDS
N_LOUDNESS_BINS = 16         # loudness.shape[-2]
NUM_SPEAKERS = 8             # promonet.NUM_SPEAKERS
SPEAKER_CHANNELS = 16        # promonet.SPEAKER_CHANNELS
FMIN = 50.0                  # promonet.FMIN
FMAX = 550.0                 # promonet.FMAX
LOG_FMIN = math.log2(FMIN)   # promonet.LOG_FMIN
LOG_FMAX = math.log2(FMAX)   # promonet.LOG_FMAX
LOUDNESS_MIN_DB = -100.0     # synthetic normalization constant
AUGMENT_PITCH = True
AUGMENT_LOUDNESS = True
NUM_PREVIOUS_SAMPLES = 32

B = 2                        # batch
T = 64                       # frames; B*T = 128 -> lane-dense kernel I/O (full vreg lane width)
BT = B * T

# feature-channel layout: ppg | pitch embedding | loudness bands | periodicity
C_FEATURES = PPG_CHANNELS + PITCH_EMBEDDING_SIZE + LOUDNESS_BANDS + 1        # 29
C_PAD = 32                                                                   # next multiple of 8
G_CHANNELS = SPEAKER_CHANNELS + int(AUGMENT_PITCH) + int(AUGMENT_LOUDNESS)

_PITCH_OFF = PPG_CHANNELS                                # 16 (pitch embedding rows 16:24)
_LOUD_OFF = PPG_CHANNELS + PITCH_EMBEDDING_SIZE          # 24 (loudness rows 24:28, per row 28)

# rows of the packed input slab [ppg | pitch | periodicity]
_ROW_PITCH = PPG_CHANNELS                                # 16
_ROW_PER = PPG_CHANNELS + 1                              # 17

GROUP = N_LOUDNESS_BINS // LOUDNESS_BANDS                # bins averaged per band (4)

# pre-fused pitch-binning constants: one fma instead of sub, div, mul
PITCH_SCALE = (PITCH_BINS - 1) / (LOG_FMAX - LOG_FMIN)
PITCH_OFFSET = -(PITCH_BINS - 1) * LOG_FMIN / (LOG_FMAX - LOG_FMIN)

# pre-fused loudness normalization: (clip(x,-100,0) + 100) / 100 == clip(x,-100,0)*0.01 + 1.0
LOUD_INV_SCALE = 1.0 / (0.0 - LOUDNESS_MIN_DB)


# ------------------------------- fused Pallas kernel -------------------------------
def _features_kernel(packed_ref, loud_ref, emb_t_ref, feat_ref):
    """Single launch, no grid: a few KiB of VMEM; every store below is a full-tile unmasked vst."""
    # --- ppg passthrough: rows 0:16 -> two aligned (8,128) tile stores ---
    feat_ref[0:PPG_CHANNELS, :] = packed_ref[0:PPG_CHANNELS, :]

    # --- pitch: clip -> log2 bin (fused scale/offset fma; int cast truncates == floor on the
    #     clipped non-negative range, matching torch .to(long)) -> one-hot -> MXU row-select ---
    hz = jnp.clip(packed_ref[_ROW_PITCH:_ROW_PITCH + 1, :], FMIN, FMAX)        # [1, BT]
    bins = jnp.clip((jnp.log2(hz) * PITCH_SCALE + PITCH_OFFSET).astype(jnp.int32),
                    0, PITCH_BINS - 1)                                          # [1, BT]
    iota = jax.lax.broadcasted_iota(jnp.int32, (PITCH_BINS, BT), 0)
    onehot = (iota == bins).astype(jnp.float32)                                 # [64, BT]
    # One tiny dot well below a single MXU tile on any generation.  If targeting v7x and the
    # default f32 decomposition misses tolerance, pin precision=jax.lax.Precision.HIGHEST here.
    pitch_emb = jnp.dot(emb_t_ref[...], onehot,
                        preferred_element_type=jnp.float32)                     # [8, BT]
    feat_ref[_PITCH_OFF:_LOUD_OFF, :] = pitch_emb                               # one full-tile store

    # --- loudness band average on the VPU: the wrapper pre-permutes the 16 rows to
    #     [k-major, band-minor], so each band mean is 3 elementwise adds of static [4, BT] slices ---
    band_sum = loud_ref[0:LOUDNESS_BANDS, :]
    for k in range(1, GROUP):
        band_sum = band_sum + loud_ref[k * LOUDNESS_BANDS:(k + 1) * LOUDNESS_BANDS, :]
    # TODO(synk): promonet.preprocess.loudness.normalize source not provided; min/max dB
    # normalization assumed, written as a single fma.
    loud_norm = jnp.clip(band_sum * (1.0 / GROUP),
                         LOUDNESS_MIN_DB, 0.0) * LOUD_INV_SCALE + 1.0           # [4, BT]

    # --- bottom tile rows 24:32 = loudness (4) | periodicity (1) | zero pad (3): ONE store ---
    per = packed_ref[_ROW_PER:_ROW_PER + 1, :]                                  # [1, BT]
    pad = jnp.zeros((C_PAD - C_FEATURES, BT), jnp.float32)
    feat_ref[_LOUD_OFF:C_PAD, :] = jnp.concatenate([loud_norm, per, pad], axis=0)


# ------------------------------- wrapper -------------------------------
def prepare_params(params):
    """Weight preprocessing hoisted out of the per-step path (run when params are created/updated)."""
    return {
        "pitch_embedding_t": jnp.asarray(params["pitch_embedding"]).T,   # [E, PITCH_BINS]
        "speaker_embedding": jnp.asarray(params["speaker_embedding"]),   # [NUM_SPEAKERS, SC]
    }


def generator_forward(prepared, loudness, pitch, periodicity, ppg, speakers,
                      spectral_balance_ratios, loudness_ratios, previous_samples):
    # ---- layout plumbing (XLA side): lane-dense [C, B*T] slabs, few-KiB copies ----
    ppg2d = jnp.transpose(ppg, (1, 0, 2)).reshape(PPG_CHANNELS, BT)
    packed = jnp.concatenate(
        [ppg2d, pitch.reshape(1, BT), periodicity.reshape(1, BT)], axis=0)       # [18, BT]: 1 DMA
    # permute loudness rows to [k-major, band-minor] so the in-kernel band average is pure VPU adds
    loud_perm = jnp.transpose(
        loudness.reshape(B, LOUDNESS_BANDS, GROUP, T), (2, 1, 0, 3)
    ).reshape(N_LOUDNESS_BINS, BT)                                               # [16, BT]: 1 DMA

    # Grid-less single launch: total footprint is a few KiB of VMEM on any TPU generation.
    # TODO(synk): if B*T grows beyond the toy 128 lanes in production, add a ("parallel",) grid over
    # the lane axis (>=512-lane tiles) so v7x's two TensorCores split the work.
    feat2d = pl.pallas_call(
        _features_kernel,
        out_shape=jax.ShapeDtypeStruct((C_PAD, BT), jnp.float32),
    )(packed, loud_perm, prepared["pitch_embedding_t"])

    # A channel-major consumer could take feat2d[:C_FEATURES] directly and skip this transpose.
    features = jnp.transpose(feat2d[:C_FEATURES].reshape(C_FEATURES, B, T), (1, 0, 2))

    # ---- prepare_global_features: a [B,16] gather + concat is essentially free in XLA ----
    cols = [prepared["speaker_embedding"][speakers]]
    if AUGMENT_PITCH:
        cols.append(spectral_balance_ratios[:, None])
    if AUGMENT_LOUDNESS:
        cols.append(loudness_ratios[:, None])
    global_features = jnp.concatenate(cols, axis=1)[:, :, None]                  # [B, G_CHANNELS, 1]

    # TODO(synk): backbone vocoder promonet.model.{FARGAN,HiFiGAN,Vocos} source is not provided;
    # returning the prepared (features, global_features) instead of self.model(features, ...).
    del previous_samples
    return features, global_features


# ------------------------------- driver -------------------------------
if __name__ == "__main__":
    key = jax.random.PRNGKey(0)
    k1, k2, k3, k4, k5, k6, k7, k8, k9 = jax.random.split(key, 9)

    params = {
        "pitch_embedding": jax.random.normal(k1, (PITCH_BINS, PITCH_EMBEDDING_SIZE), jnp.float32),
        "speaker_embedding": jax.random.normal(k2, (NUM_SPEAKERS, SPEAKER_CHANNELS), jnp.float32),
    }
    prepared = prepare_params(params)   # hoisted weight preprocessing (not in the per-call path)

    loudness = jax.random.uniform(k3, (B, N_LOUDNESS_BINS, T), jnp.float32, -80.0, 0.0)
    pitch = jax.random.uniform(k4, (B, T), jnp.float32, 40.0, 600.0)
    periodicity = jax.random.uniform(k5, (B, T), jnp.float32, 0.0, 1.0)
    ppg = jax.nn.softmax(jax.random.normal(k6, (B, PPG_CHANNELS, T), jnp.float32), axis=1)
    speakers = jax.random.randint(k7, (B,), 0, NUM_SPEAKERS, jnp.int32)
    spectral_balance_ratios = jax.random.uniform(k8, (B,), jnp.float32, 0.8, 1.2)
    loudness_ratios = jax.random.uniform(k9, (B,), jnp.float32, 0.8, 1.2)   # distinct key from sb
    previous_samples = jnp.zeros((B, 1, NUM_PREVIOUS_SAMPLES), jnp.float32)

    features, global_features = jax.jit(generator_forward)(
        prepared, loudness, pitch, periodicity, ppg, speakers,
        spectral_balance_ratios, loudness_ratios, previous_samples)
    jax.block_until_ready((features, global_features))

    # ---- pure-JAX reference check ----
    hz = jnp.clip(pitch, FMIN, FMAX)
    bins = jnp.clip((jnp.log2(hz) * PITCH_SCALE + PITCH_OFFSET).astype(jnp.int32),
                    0, PITCH_BINS - 1)
    pitch_emb_ref = jnp.transpose(params["pitch_embedding"][bins], (0, 2, 1))      # [B, E, T]
    step = N_LOUDNESS_BINS / LOUDNESS_BANDS
    avg_ref = jnp.stack(
        [loudness[:, int(b * step):int((b + 1) * step)].mean(axis=-2) for b in range(LOUDNESS_BANDS)],
        axis=1)
    loud_norm_ref = (jnp.clip(avg_ref, LOUDNESS_MIN_DB, 0.0) - LOUDNESS_MIN_DB) / (0.0 - LOUDNESS_MIN_DB)
    feat_ref = jnp.concatenate([ppg, pitch_emb_ref, loud_norm_ref, periodicity[:, None]], axis=1)
    glob_ref = jnp.concatenate(
        [params["speaker_embedding"][speakers],
         spectral_balance_ratios[:, None], loudness_ratios[:, None]], axis=1)[:, :, None]

    assert features.shape == (B, C_FEATURES, T) and global_features.shape == (B, G_CHANNELS, 1)
    assert jnp.allclose(features, feat_ref, rtol=1e-5, atol=1e-5)
    assert jnp.allclose(global_features, glob_ref, rtol=1e-5, atol=1e-5)

    print("KERNEL_OK")
</pallas_src>

<mosaic_0001>
module attributes {stable_mosaic.version = 11 : i64} {
  func.func @_features_kernel(%arg0: memref<18x128xf32, #tpu.memory_space<vmem>>, %arg1: memref<16x128xf32, #tpu.memory_space<vmem>>, %arg2: memref<8x64xf32, #tpu.memory_space<vmem>>, %arg3: memref<32x128xf32, #tpu.memory_space<vmem>>) attributes {dimension_semantics = [], scalar_prefetch = 0 : i64, scratch_operands = 0 : i64, tpu.core_type = #tpu.core_type<tc>} {
    %c0 = arith.constant 0 : index
    %c0_0 = arith.constant 0 : index
    %0 = vector.load %arg0[%c0, %c0_0] : memref<18x128xf32, #tpu.memory_space<vmem>>, vector<16x128xf32>
    %c0_1 = arith.constant 0 : index
    %c0_2 = arith.constant 0 : index
    %1 = vector.load %arg3[%c0_1, %c0_2] : memref<32x128xf32, #tpu.memory_space<vmem>>, vector<16x128xf32>
    tpu.vector_store %arg3[%c0_1, %c0_2], %0 {strides = array<i32>} : memref<32x128xf32, #tpu.memory_space<vmem>>, vector<16x128xf32>,
    %c16 = arith.constant 16 : index
    %c0_3 = arith.constant 0 : index
    %2 = vector.load %arg0[%c16, %c0_3] : memref<18x128xf32, #tpu.memory_space<vmem>>, vector<1x128xf32>
    %cst = arith.constant 5.000000e+01 : f32
    %cst_4 = arith.constant 5.500000e+02 : f32
    %3 = vector.broadcast %cst : f32 to vector<1x128xf32>
    %4 = arith.maximumf %3, %2 : vector<1x128xf32>
    %5 = vector.broadcast %cst_4 : f32 to vector<1x128xf32>
    %6 = arith.minimumf %5, %4 : vector<1x128xf32>
    %7 = math.log %6 : vector<1x128xf32>
    %cst_5 = arith.constant 2.000000e+00 : f32
    %8 = math.log %cst_5 : f32
    %9 = vector.broadcast %8 : f32 to vector<1x128xf32>
    %10 = arith.divf %7, %9 : vector<1x128xf32>
    %cst_6 = arith.constant 18.2110844 : f32
    %11 = vector.broadcast %cst_6 : f32 to vector<1x128xf32>
    %12 = arith.mulf %10, %11 : vector<1x128xf32>
    %cst_7 = arith.constant -102.780739 : f32
    %13 = vector.broadcast %cst_7 : f32 to vector<1x128xf32>
    %14 = arith.addf %12, %13 : vector<1x128xf32>
    %15 = arith.fptosi %14 : vector<1x128xf32> to vector<1x128xi32>
    %c0_i32 = arith.constant 0 : i32
    %c63_i32 = arith.constant 63 : i32
    %16 = vector.broadcast %c0_i32 : i32 to vector<1x128xi32>
    %17 = arith.maxsi %16, %15 : vector<1x128xi32>
    %18 = vector.broadcast %c63_i32 : i32 to vector<1x128xi32>
    %19 = arith.minsi %18, %17 : vector<1x128xi32>
    %20 = tpu.iota {dimensions = array<i32: 0>} : vector<64x128xi32>
    %21 = vector.broadcast %19 : vector<1x128xi32> to vector<64x128xi32>
    %22 = arith.cmpi eq, %20, %21 : vector<64x128xi32>
    %23 = arith.extui %22 : vector<64x128xi1> to vector<64x128xi32>
    %24 = arith.sitofp %23 : vector<64x128xi32> to vector<64x128xf32>
    %c0_8 = arith.constant 0 : index
    %c0_9 = arith.constant 0 : index
    %25 = vector.load %arg2[%c0_8, %c0_9] : memref<8x64xf32, #tpu.memory_space<vmem>>, vector<8x64xf32>
    %cst_10 = arith.constant dense<0.000000e+00> : vector<8x128xf32>
    %26 = tpu.matmul %25, %24, %cst_10 {dimension_numbers = #tpu.dot_dimension_numbers<[1], [0], [0], [1], [0, 0, 1, 1], [], []>} : vector<8x64xf32>, vector<64x128xf32>, vector<8x128xf32> -> vector<8x128xf32>
    %c16_11 = arith.constant 16 : index
    %c0_12 = arith.constant 0 : index
    %27 = vector.load %arg3[%c16_11, %c0_12] : memref<32x128xf32, #tpu.memory_space<vmem>>, vector<8x128xf32>
    tpu.vector_store %arg3[%c16_11, %c0_12], %26 {strides = array<i32>} : memref<32x128xf32, #tpu.memory_space<vmem>>, vector<8x128xf32>,
    %c0_13 = arith.constant 0 : index
    %c0_14 = arith.constant 0 : index
    %28 = vector.load %arg1[%c0_13, %c0_14] : memref<16x128xf32, #tpu.memory_space<vmem>>, vector<4x128xf32>
    %c4 = arith.constant 4 : index
    %c0_15 = arith.constant 0 : index
    %29 = vector.load %arg1[%c4, %c0_15] : memref<16x128xf32, #tpu.memory_space<vmem>>, vector<4x128xf32>
    %30 = arith.addf %28, %29 : vector<4x128xf32>
    %c8 = arith.constant 8 : index
    %c0_16 = arith.constant 0 : index
    %31 = vector.load %arg1[%c8, %c0_16] : memref<16x128xf32, #tpu.memory_space<vmem>>, vector<4x128xf32>
    %32 = arith.addf %30, %31 : vector<4x128xf32>
    %c12 = arith.constant 12 : index
    %c0_17 = arith.constant 0 : index
    %33 = vector.load %arg1[%c12, %c0_17] : memref<16x128xf32, #tpu.memory_space<vmem>>, vector<4x128xf32>
    %34 = arith.addf %32, %33 : vector<4x128xf32>
    %cst_18 = arith.constant 2.500000e-01 : f32
    %35 = vector.broadcast %cst_18 : f32 to vector<4x128xf32>
    %36 = arith.mulf %34, %35 : vector<4x128xf32>
    %cst_19 = arith.constant -1.000000e+02 : f32
    %cst_20 = arith.constant 0.000000e+00 : f32
    %37 = vector.broadcast %cst_19 : f32 to vector<4x128xf32>
    %38 = arith.maximumf %37, %36 : vector<4x128xf32>
    %39 = vector.broadcast %cst_20 : f32 to vector<4x128xf32>
    %40 = arith.minimumf %39, %38 : vector<4x128xf32>
    %cst_21 = arith.constant 0.00999999977 : f32
    %41 = vector.broadcast %cst_21 : f32 to vector<4x128xf32>
    %42 = arith.mulf %40, %41 : vector<4x128xf32>
    %cst_22 = arith.constant 1.000000e+00 : f32
    %43 = vector.broadcast %cst_22 : f32 to vector<4x128xf32>
    %44 = arith.addf %42, %43 : vector<4x128xf32>
    %c17 = arith.constant 17 : index
    %c0_23 = arith.constant 0 : index
    %45 = vector.load %arg0[%c17, %c0_23] : memref<18x128xf32, #tpu.memory_space<vmem>>, vector<1x128xf32>
    %cst_24 = arith.constant 0.000000e+00 : f32
    %46 = vector.broadcast %cst_24 : f32 to vector<3x128xf32>
    %47 = tpu.concatenate %44, %45, %46 in 0 : vector<4x128xf32>, vector<1x128xf32>, vector<3x128xf32> -> vector<8x128xf32>
    %c24 = arith.constant 24 : index
    %c0_25 = arith.constant 0 : index
    %48 = vector.load %arg3[%c24, %c0_25] : memref<32x128xf32, #tpu.memory_space<vmem>>, vector<8x128xf32>
    tpu.vector_store %arg3[%c24, %c0_25], %47 {strides = array<i32>} : memref<32x128xf32, #tpu.memory_space<vmem>>, vector<8x128xf32>,
    return
  }
}

</mosaic_0001>

<llo_original>
// kernel: generator_forward.1
$region0: #{generator_forward.1}
  #allocation0 [shape = 'u32[]', space=smem, size = 0x4, offset = 0x4, fixed_abs, tag = 'smem constant byte address 0x4 - core index']
  #allocation1 [shape = 'u32[72,128]{1,0:T(1,128)}', space=vmem, size = 0x9000, scoped, tag = 'internal scratch']
  %s0 = inlined_call_operand.vmem [shape: f32[18,128], index: 0, kind: input, shape index: {}]
  %s1 = inlined_call_operand.vmem [shape: f32[16,128], index: 1, kind: input, shape index: {}]
  %s2 = inlined_call_operand.vmem [shape: f32[8,64], index: 2, kind: input, shape index: {}]
  %s3 = inlined_call_operand.vmem [shape: f32[32,128], index: 3, kind: output, shape index: {}]
  %s4 = sld [smem:[#allocation0]]
  $region22: #{generator_forward.1} parent=0
    _
  %s6 = ssub.s32 1, %s4
  %s7 = scalar_select 0, %s6, %s4
  // Predicated region
  $region2: #{generator_forward.1} parent=0 // pred_check
    _
  $region3: #{generator_forward.1} parent=0 // pred_check_branch
    %9 = sbr.rel (0) target = $region5
  $region4: #{generator_forward.1} parent=0 // pred_region
    _
  $region5: #{generator_forward.1} parent=0 // pred_fallthru
    _
  // Predicated region
  $region6: #{generator_forward.1} parent=0 // pred_check
    _
  $region7: #{generator_forward.1} parent=0 // pred_check_branch
    %11 = sbr.rel (0) target = $region9
  $region8: #{generator_forward.1} parent=0 // pred_region
    _
  $region9: #{generator_forward.1} parent=0 // pred_fallthru
    _
  // Predicated region
  $region10: #{generator_forward.1} parent=0 // pred_check
    _
  $region11: #{generator_forward.1} parent=0 // pred_check_branch
    %13 = sbr.rel (0) target = $region13
  $region12: #{generator_forward.1} parent=0 // pred_region
    _
  $region13: #{generator_forward.1} parent=0 // pred_fallthru
    _
  %v14 = vld [vmem:[%s0] sm:$0xff]
  %v15 = vld [vmem:[%s0 + $0x8] sm:$0xff]
  %16 = vst [vmem:[%s3] sm:$0xff] %v14
  %17 = vst [vmem:[%s3 + $0x8] sm:$0xff] %v15
  %v18 = vld [vmem:[%s0 + $0x10] sm:$0x1]
  %v19 = vmax.f32 %v18, 50.0
  %v20 = vmin.f32 %v19, 550.0
  %v21 = vlog2.pop %v20
  %v22 = vmul.f32 %v21, 0.6931472
  %v23 = vrcp.pop 0.6931472
  %v24 = vmul.f32 0.6931472, %v23
  %v25 = vsub.f32 1.0, %v24
  %v26 = vmul.f32 %v23, %v25
  %v27 = vadd.f32 %v23, %v26
  %vm28 = vweird.f32 %v23
  %v29 = vsel %vm28, %v23, %v27
  %v30 = vmul.f32 %v22, %v29
  %v31 = vmul.f32 %v30, 18.211084
  %v32 = vadd.f32 %v31, -102.78074
  %v33 = vcvt.f32.s32.to.zero.pseudo %v32
  %vm34 = vcmp.gt.s32.totalorder %v33, 0
  %v35 = vsel %vm34, %v33, 0
  %vm36 = vcmp.lt.s32.totalorder %v35, 63
  %v37 = vsel %vm36, %v35, 63
  %v38 = vlaneseq
  %v39 = vshrl.u32 %v38, 7
  %v40 = vadd.s32 %v39, 8
  %v41 = vadd.s32 %v39, 16
  %v42 = vadd.s32 %v39, 24
  %v43 = vadd.s32 %v39, 32
  %v44 = vadd.s32 %v39, 40
  %v45 = vadd.s32 %v39, 48
  %v46 = vadd.s32 %v39, 56
  %v47 = vperm.slane %v37, 0
  %vm48 = vcmp.eq.s32.totalorder %v39, %v47
  %vm49 = vcmp.eq.s32.totalorder %v40, %v47
  %vm50 = vcmp.eq.s32.totalorder %v41, %v47
  %vm51 = vcmp.eq.s32.totalorder %v42, %v47
  %vm52 = vcmp.eq.s32.totalorder %v43, %v47
  %vm53 = vcmp.eq.s32.totalorder %v44, %v47
  %vm54 = vcmp.eq.s32.totalorder %v45, %v47
  %vm55 = vcmp.eq.s32.totalorder %v46, %v47
  %v56 = vsel %vm48, 1, 0
  %v57 = vsel %vm49, 1, 0
  %v58 = vsel %vm50, 1, 0
  %v59 = vsel %vm51, 1, 0
  %v60 = vsel %vm52, 1, 0
  %v61 = vsel %vm53, 1, 0
  %v62 = vsel %vm54, 1, 0
  %v63 = vsel %vm55, 1, 0
  %v64 = vcvt.s32.f32 %v56
  %v65 = vcvt.s32.f32 %v57
  %v66 = vcvt.s32.f32 %v58
  %v67 = vcvt.s32.f32 %v59
  %v68 = vcvt.s32.f32 %v60
  %v69 = vcvt.s32.f32 %v61
  %v70 = vcvt.s32.f32 %v62
  %v71 = vcvt.s32.f32 %v63
  %v72 = vld [vmem:[%s2] sm:$0xff]
  %vm73 = vcmask 523264
  %v75 = vsel %vm73, %v72, 0
  %77 = vmatpush.msra.mxu0 0.0
  %78 = vmatpush.msra.mxu0 0.0
  %79 = vmatpush.msra.mxu0 0.0
  %80 = vmatpush.msra.mxu0 0.0
  %81 = vmatpush.msra.mxu0 0.0
  %82 = vmatpush.msra.mxu0 0.0
  %83 = vmatpush.msra.mxu0 0.0
  %84 = vmatpush.msra.mxu0 0.0
  %85 = vmatpush.msra.mxu0 %v71
  %86 = vmatpush.msra.mxu0 %v70
  %87 = vmatpush.msra.mxu0 %v69
  %88 = vmatpush.msra.mxu0 %v68
  %89 = vmatpush.msra.mxu0 %v67
  %90 = vmatpush.msra.mxu0 %v66
  %91 = vmatpush.msra.mxu0 %v65
  %92 = vmatpush.msra.mxu0 %v64
  %93 = vmatmul.f32.gmra.mxu0 %v75
  %v94 = vpop.f32.mrf.mxu0
  %v95 = vadd.f32 0.0, %v94
  %96 = vdwg.mxu0
  %97 = vst [vmem:[%s3 + $0x10] sm:$0xff] %v95
  %v98 = vld [vmem:[%s1] sm:$0xf]
  %v99 = vld [vmem:[%s1 + $0x4] sm:$0xf]
  %v100 = vadd.f32 %v98, %v99
  %v101 = vld [vmem:[%s1 + $0x8] sm:$0xf]
  %v102 = vadd.f32 %v100, %v101
  %v103 = vld [vmem:[%s1 + $0xc] sm:$0xf]
  %v104 = vadd.f32 %v102, %v103
  %v105 = vmul.f32 %v104, 0.25
  %v106 = vmax.f32 %v105, -100.0
  %v107 = vmin.f32 %v106, 0.0
  %v108 = vmul.f32 %v107, 0.01
  %v109 = vadd.f32 %v108, 1.0
  %v110 = vld [vmem:[%s0 + $0x11] sm:$0x1]
  %v112 = vrot.slane %v110, 4
  %vm114 = vcmask 1043456
  %v115 = vsel %vm114, %v109, %v112
  %vm116 = vcmask 1044480
  %v117 = vsel %vm116, %v115, 0.0
  %118 = vst [vmem:[%s3 + $0x18] sm:$0xff] %v117
  // Predicated region
  $region14: #{generator_forward.1} parent=0 // pred_check
    _
  $region15: #{generator_forward.1} parent=0 // pred_check_branch
    %120 = sbr.rel (0) target = $region17
  $region16: #{generator_forward.1} parent=0 // pred_region
    _
  $region17: #{generator_forward.1} parent=0 // pred_fallthru
    _
  // Predicated region
  $region18: #{generator_forward.1} parent=0 // pred_check
    _
  $region19: #{generator_forward.1} parent=0 // pred_check_branch
    %122 = sbr.rel (0) target = $region21
  $region20: #{generator_forward.1} parent=0 // pred_region
    _
  $region21: #{generator_forward.1} parent=0 // pred_fallthru
    _

</llo_original>
